<compile_context>
chip_gen: v6e
topology: v6e:2x2x1
jax: 0.10.0
libtpu: 0.0.40
codegen_flags: <defaults>
</compile_context>

<pallas_src>
import functools
import numpy as np

import jax
import jax.numpy as jnp
from jax import lax
from jax.experimental import pallas as pl

# ---- module constants (consistent with the surrounding net) ----
RES_BLOCK_FILLTERS = 8          # feature channels -> Policy input channels
IND = RES_BLOCK_FILLTERS
KERNELS = 2                     # 1x1-conv output channels
N, H, W = 2, 16, 16             # batch / spatial
OUTD = H * W                    # policy logits (board positions) = 256
EPS = 1e-5                      # BatchNorm eps


# ------------------------------------------------------------------
# Fused Pallas kernel: 1x1 conv (+ folded BN + bias) + ReLU + flatten
#                      + Linear + log_softmax, all resident in VMEM.
#
#   x_ref  : (Cin, N*HW)      channel-major activations (lane-dense)
#   w1_ref : (Kc, Cin)        folded conv weight (BN scale folded in)
#   b1_ref : (Kc, 1)          folded conv+BN bias
#   lt_ref : (Kc*HW, OUTD)    linear weight, transposed (rows in torch
#                             .view order: j = c*HW + h*W + w)
#   lb_ref : (1, OUTD)        linear bias
#   o_ref  : (N, OUTD)        log-probabilities
# ------------------------------------------------------------------
def _policy_kernel(x_ref, w1_ref, b1_ref, lt_ref, lb_ref, o_ref, *, n, hw, kc):
    # 1x1 conv + folded BatchNorm + ReLU as ONE lane-dense matmul:
    #   (kc, cin) @ (cin, n*hw) -> (kc, n*hw)
    h = jnp.dot(w1_ref[...], x_ref[...], preferred_element_type=jnp.float32)
    h = jnp.maximum(h + b1_ref[...], 0.0)        # (kc, n*hw)

    # Linear over the torch flatten order (j = c*hw + p) + log_softmax.
    # h[c, b*hw + p] == relu(conv_bn(x))[b, c, p], so the per-batch flat
    # vector is exactly the concatenation over c of h[c, b*hw:(b+1)*hw];
    # we contract each channel slice against the matching rows of L^T,
    # avoiding any in-kernel reshape/relayout.
    for b in range(n):                            # n == 2, unrolled
        y = lb_ref[...]                           # (1, outd)
        for c in range(kc):                       # kc == 2, unrolled
            y = y + jnp.dot(h[c:c + 1, b * hw:(b + 1) * hw],
                            lt_ref[c * hw:(c + 1) * hw, :],
                            preferred_element_type=jnp.float32)
        # log_softmax over the 256 lanes
        m = jnp.max(y, axis=-1, keepdims=True)
        z = y - m
        lse = jnp.log(jnp.sum(jnp.exp(z), axis=-1, keepdims=True))
        o_ref[b:b + 1, :] = (z - lse).astype(o_ref.dtype)


def policy_forward(x_nchw, params):
    """x_nchw: (N, IND, H, W) f32 -> (N, OUTD) log-probabilities."""
    n, cin, h, w = x_nchw.shape
    hw = h * w
    kc = params["conv_w"].shape[0]
    outd = params["lin_w"].shape[0]

    # Fold conv bias + eval-mode BatchNorm into a per-channel scale/bias.
    scale = params["bn_gamma"] * lax.rsqrt(params["bn_var"] + EPS)
    w1f = (params["conv_w"].reshape(kc, cin) * scale[:, None]).astype(jnp.float32)
    b1f = (scale * (params["conv_b"] - params["bn_mean"])
           + params["bn_beta"]).reshape(kc, 1).astype(jnp.float32)

    # Channel-major, lane-dense activation slab: (Cin, N*H*W).
    x_cm = jnp.transpose(x_nchw, (1, 0, 2, 3)).reshape(cin, n * hw)
    x_cm = x_cm.astype(jnp.float32)

    # Linear weight transposed; its row order already matches torch's
    # .view(-1, kc*H*W) flatten order (j = c*HW + h*W + w).
    lt = params["lin_w"].T.astype(jnp.float32)            # (kc*hw, outd)
    lb = params["lin_b"].reshape(1, outd).astype(jnp.float32)

    kernel = functools.partial(_policy_kernel, n=n, hw=hw, kc=kc)
    return pl.pallas_call(
        kernel,
        out_shape=jax.ShapeDtypeStruct((n, outd), jnp.float32),
    )(x_cm, w1f, b1f, lt, lb)


# ------------------------------------------------------------------
# Parameter construction (deterministic, synthetic)
# ------------------------------------------------------------------
def init_policy_params(key, ind=IND, kernels=KERNELS, outd=OUTD):
    ks = jax.random.split(key, 8)
    return dict(
        conv_w=0.1 * jax.random.normal(ks[0], (kernels, ind, 1, 1), jnp.float32),
        conv_b=0.1 * jax.random.normal(ks[1], (kernels,), jnp.float32),
        bn_gamma=jax.random.uniform(ks[2], (kernels,), jnp.float32, 0.5, 1.5),
        bn_beta=0.1 * jax.random.normal(ks[3], (kernels,), jnp.float32),
        bn_mean=0.1 * jax.random.normal(ks[4], (kernels,), jnp.float32),
        bn_var=jax.random.uniform(ks[5], (kernels,), jnp.float32, 0.5, 1.5),
        lin_w=jax.random.uniform(ks[6], (outd, kernels * outd), jnp.float32,
                                 -0.1, 0.1),
        lin_b=jax.random.uniform(ks[7], (outd,), jnp.float32, -0.05, 0.05),
    )


# ------------------------------------------------------------------
# Pure-JAX reference (mirrors the PyTorch forward, eval-mode BN)
# ------------------------------------------------------------------
def policy_reference(x_nchw, params):
    kc = params["conv_w"].shape[0]
    w2d = params["conv_w"].reshape(kc, -1)
    y = jnp.einsum("nchw,kc->nkhw", x_nchw, w2d,
                   precision=lax.Precision.HIGHEST)
    y = y + params["conv_b"][None, :, None, None]
    scale = params["bn_gamma"] / jnp.sqrt(params["bn_var"] + EPS)
    shift = params["bn_beta"] - params["bn_mean"] * scale
    y = y * scale[None, :, None, None] + shift[None, :, None, None]
    y = jnp.maximum(y, 0.0)
    flat = y.reshape(x_nchw.shape[0], -1)                 # torch .view order
    logits = jnp.dot(flat, params["lin_w"].T,
                     precision=lax.Precision.HIGHEST) + params["lin_b"]
    return jax.nn.log_softmax(logits, axis=-1)


if __name__ == "__main__":
    key = jax.random.PRNGKey(0)
    k_param, k_x = jax.random.split(key)
    params = init_policy_params(k_param)
    x = jax.random.normal(k_x, (N, IND, H, W), jnp.float32)   # NCHW input

    out = jax.block_until_ready(policy_forward(x, params))
    ref = jax.block_until_ready(policy_reference(x, params))

    assert out.shape == (N, OUTD)
    assert np.allclose(np.asarray(out), np.asarray(ref), atol=2e-3, rtol=2e-3)
    # log-softmax rows must normalize
    assert np.allclose(np.exp(np.asarray(out)).sum(-1), 1.0, atol=1e-3)

    print("KERNEL_OK")
</pallas_src>

<mosaic_0001>
module attributes {stable_mosaic.version = 11 : i64} {
  func.func @_policy_kernel(%arg0: memref<8x512xf32, #tpu.memory_space<vmem>>, %arg1: memref<2x8xf32, #tpu.memory_space<vmem>>, %arg2: memref<2x1xf32, #tpu.memory_space<vmem>>, %arg3: memref<512x256xf32, #tpu.memory_space<vmem>>, %arg4: memref<1x256xf32, #tpu.memory_space<vmem>>, %arg5: memref<2x256xf32, #tpu.memory_space<vmem>>) attributes {dimension_semantics = [], scalar_prefetch = 0 : i64, scratch_operands = 0 : i64, tpu.core_type = #tpu.core_type<tc>} {
    %c0 = arith.constant 0 : index
    %c0_0 = arith.constant 0 : index
    %0 = vector.load %arg1[%c0, %c0_0] : memref<2x8xf32, #tpu.memory_space<vmem>>, vector<2x8xf32>
    %c0_1 = arith.constant 0 : index
    %c0_2 = arith.constant 0 : index
    %1 = vector.load %arg0[%c0_1, %c0_2] : memref<8x512xf32, #tpu.memory_space<vmem>>, vector<8x512xf32>
    %cst = arith.constant dense<0.000000e+00> : vector<2x512xf32>
    %2 = tpu.matmul %0, %1, %cst {dimension_numbers = #tpu.dot_dimension_numbers<[1], [0], [0], [1], [0, 0, 1, 1], [], []>} : vector<2x8xf32>, vector<8x512xf32>, vector<2x512xf32> -> vector<2x512xf32>
    %c0_3 = arith.constant 0 : index
    %c0_4 = arith.constant 0 : index
    %3 = vector.load %arg2[%c0_3, %c0_4] : memref<2x1xf32, #tpu.memory_space<vmem>>, vector<2x1xf32>
    %4 = vector.broadcast %3 : vector<2x1xf32> to vector<2x512xf32>
    %5 = arith.addf %2, %4 : vector<2x512xf32>
    %cst_5 = arith.constant 0.000000e+00 : f32
    %6 = vector.broadcast %cst_5 : f32 to vector<2x512xf32>
    %7 = arith.maximumf %5, %6 : vector<2x512xf32>
    %c0_6 = arith.constant 0 : index
    %c0_7 = arith.constant 0 : index
    %8 = vector.load %arg4[%c0_6, %c0_7] : memref<1x256xf32, #tpu.memory_space<vmem>>, vector<1x256xf32>
    %9 = vector.extract_strided_slice %7 {offsets = [0, 0], sizes = [1, 256], strides = [1, 1]} : vector<2x512xf32> to vector<1x256xf32>
    %c0_8 = arith.constant 0 : index
    %c0_9 = arith.constant 0 : index
    %10 = vector.load %arg3[%c0_8, %c0_9] : memref<512x256xf32, #tpu.memory_space<vmem>>, vector<256x256xf32>
    %cst_10 = arith.constant dense<0.000000e+00> : vector<1x256xf32>
    %11 = tpu.matmul %9, %10, %cst_10 {dimension_numbers = #tpu.dot_dimension_numbers<[1], [0], [0], [1], [0, 0, 1, 1], [], []>} : vector<1x256xf32>, vector<256x256xf32>, vector<1x256xf32> -> vector<1x256xf32>
    %12 = arith.addf %8, %11 : vector<1x256xf32>
    %13 = vector.extract_strided_slice %7 {offsets = [1, 0], sizes = [1, 256], strides = [1, 1]} : vector<2x512xf32> to vector<1x256xf32>
    %c256 = arith.constant 256 : index
    %c0_11 = arith.constant 0 : index
    %14 = vector.load %arg3[%c256, %c0_11] : memref<512x256xf32, #tpu.memory_space<vmem>>, vector<256x256xf32>
    %cst_12 = arith.constant dense<0.000000e+00> : vector<1x256xf32>
    %15 = tpu.matmul %13, %14, %cst_12 {dimension_numbers = #tpu.dot_dimension_numbers<[1], [0], [0], [1], [0, 0, 1, 1], [], []>} : vector<1x256xf32>, vector<256x256xf32>, vector<1x256xf32> -> vector<1x256xf32>
    %16 = arith.addf %12, %15 : vector<1x256xf32>
    %cst_13 = arith.constant dense<0xFF800000> : vector<1xf32>
    %17 = vector.multi_reduction <maximumf>, %16, %cst_13 [1] : vector<1x256xf32> to vector<1xf32>
    %18 = vector.shape_cast %17 : vector<1xf32> to vector<1x1xf32>
    %19 = vector.broadcast %18 : vector<1x1xf32> to vector<1x256xf32>
    %20 = arith.subf %16, %19 : vector<1x256xf32>
    %21 = math.exp %20 : vector<1x256xf32>
    %cst_14 = arith.constant dense<0.000000e+00> : vector<1xf32>
    %22 = vector.multi_reduction <add>, %21, %cst_14 [1] : vector<1x256xf32> to vector<1xf32>
    %23 = vector.shape_cast %22 : vector<1xf32> to vector<1x1xf32>
    %24 = math.log %23 : vector<1x1xf32>
    %25 = vector.broadcast %24 : vector<1x1xf32> to vector<1x256xf32>
    %26 = arith.subf %20, %25 : vector<1x256xf32>
    %c0_15 = arith.constant 0 : index
    %c0_16 = arith.constant 0 : index
    %27 = vector.load %arg5[%c0_15, %c0_16] : memref<2x256xf32, #tpu.memory_space<vmem>>, vector<1x256xf32>
    tpu.vector_store %arg5[%c0_15, %c0_16], %26 {strides = array<i32>} : memref<2x256xf32, #tpu.memory_space<vmem>>, vector<1x256xf32>,
    %c0_17 = arith.constant 0 : index
    %c0_18 = arith.constant 0 : index
    %28 = vector.load %arg4[%c0_17, %c0_18] : memref<1x256xf32, #tpu.memory_space<vmem>>, vector<1x256xf32>
    %29 = vector.extract_strided_slice %7 {offsets = [0, 256], sizes = [1, 256], strides = [1, 1]} : vector<2x512xf32> to vector<1x256xf32>
    %c0_19 = arith.constant 0 : index
    %c0_20 = arith.constant 0 : index
    %30 = vector.load %arg3[%c0_19, %c0_20] : memref<512x256xf32, #tpu.memory_space<vmem>>, vector<256x256xf32>
    %cst_21 = arith.constant dense<0.000000e+00> : vector<1x256xf32>
    %31 = tpu.matmul %29, %30, %cst_21 {dimension_numbers = #tpu.dot_dimension_numbers<[1], [0], [0], [1], [0, 0, 1, 1], [], []>} : vector<1x256xf32>, vector<256x256xf32>, vector<1x256xf32> -> vector<1x256xf32>
    %32 = arith.addf %28, %31 : vector<1x256xf32>
    %33 = vector.extract_strided_slice %7 {offsets = [1, 256], sizes = [1, 256], strides = [1, 1]} : vector<2x512xf32> to vector<1x256xf32>
    %c256_22 = arith.constant 256 : index
    %c0_23 = arith.constant 0 : index
    %34 = vector.load %arg3[%c256_22, %c0_23] : memref<512x256xf32, #tpu.memory_space<vmem>>, vector<256x256xf32>
    %cst_24 = arith.constant dense<0.000000e+00> : vector<1x256xf32>
    %35 = tpu.matmul %33, %34, %cst_24 {dimension_numbers = #tpu.dot_dimension_numbers<[1], [0], [0], [1], [0, 0, 1, 1], [], []>} : vector<1x256xf32>, vector<256x256xf32>, vector<1x256xf32> -> vector<1x256xf32>
    %36 = arith.addf %32, %35 : vector<1x256xf32>
    %cst_25 = arith.constant dense<0xFF800000> : vector<1xf32>
    %37 = vector.multi_reduction <maximumf>, %36, %cst_25 [1] : vector<1x256xf32> to vector<1xf32>
    %38 = vector.shape_cast %37 : vector<1xf32> to vector<1x1xf32>
    %39 = vector.broadcast %38 : vector<1x1xf32> to vector<1x256xf32>
    %40 = arith.subf %36, %39 : vector<1x256xf32>
    %41 = math.exp %40 : vector<1x256xf32>
    %cst_26 = arith.constant dense<0.000000e+00> : vector<1xf32>
    %42 = vector.multi_reduction <add>, %41, %cst_26 [1] : vector<1x256xf32> to vector<1xf32>
    %43 = vector.shape_cast %42 : vector<1xf32> to vector<1x1xf32>
    %44 = math.log %43 : vector<1x1xf32>
    %45 = vector.broadcast %44 : vector<1x1xf32> to vector<1x256xf32>
    %46 = arith.subf %40, %45 : vector<1x256xf32>
    %c1 = arith.constant 1 : index
    %c0_27 = arith.constant 0 : index
    %47 = vector.load %arg5[%c1, %c0_27] : memref<2x256xf32, #tpu.memory_space<vmem>>, vector<1x256xf32>
    tpu.vector_store %arg5[%c1, %c0_27], %46 {strides = array<i32>} : memref<2x256xf32, #tpu.memory_space<vmem>>, vector<1x256xf32>,
    return
  }
}

</mosaic_0001>

<llo_original>
// kernel: tpu_custom_call.1
$region0: #{tpu_custom_call.1}
  #allocation0 [shape = 'u32[]', space=smem, size = 0x4, offset = 0x4, fixed_abs, tag = 'smem constant byte address 0x4 - core index']
  #allocation1 [shape = 'u32[144,128]{1,0:T(1,128)}', space=vmem, size = 0x12000, scoped, tag = 'internal scratch']
  %s0 = inlined_call_operand.hbm [shape: f32[8,512], index: 0, kind: input, shape index: {}]
  %s1 = inlined_call_operand.vmem [shape: f32[2,8], index: 1, kind: input, shape index: {}]
  %s2 = inlined_call_operand.vmem [shape: f32[2,1], index: 2, kind: input, shape index: {}]
  %s3 = inlined_call_operand.hbm [shape: f32[512,256], index: 3, kind: input, shape index: {}]
  %s4 = inlined_call_operand.vmem [shape: f32[1,256], index: 4, kind: input, shape index: {}]
  %s5 = inlined_call_operand.hbm [shape: f32[2,256], index: 5, kind: output, shape index: {}]
  %s6 = sld [smem:[#allocation0]]
  $region38: #{tpu_custom_call.1} parent=0
    _
  %s8 = ssub.s32 1, %s6
  %s9 = scalar_select 0, %s8, %s6
  $region1: #{tpu_custom_call.1} parent=0
    #allocation2 [shape = 'u8[16384]{0}', space=vmem, size = 0x4000, scoped, tag = 'input window, operand 0, single buffered']
    #allocation3 [shape = 's32[1]{0}', space=sflag, size = 0x4, scoped, tag = 'scoped memory for tpu_custom_call.1']
    #allocation4 [shape = 's32[1]{0}', space=sflag, size = 0x4, scoped, tag = 'scoped memory for tpu_custom_call.1']
    #allocation5 [shape = 'u8[524288]{0}', space=vmem, size = 0x80000, scoped, tag = 'input window, operand 3, single buffered']
    #allocation6 [shape = 's32[1]{0}', space=sflag, size = 0x4, scoped, tag = 'scoped memory for tpu_custom_call.1']
    #allocation7 [shape = 'u8[2048]{0}', space=vmem, size = 0x800, scoped, tag = 'output window, operand 0, single buffered']
    %10 = vsyncpa [#allocation3], 0
    %11 = vsyncpa [#allocation6], 0
    %12 = vsyncpa [#allocation4], 0
    // Predicated region
    $region2: #{tpu_custom_call.1} parent=1 // pred_check
      _
    $region3: #{tpu_custom_call.1} parent=1 // pred_check_branch
      %14 = sbr.rel (0) target = $region5
    $region4: #{tpu_custom_call.1} parent=1 // pred_region
      %s16 = ssub.s32 512, 512
      %17 = vsyncadd [#allocation3], %s16
      %s19 = sshll.u32 [#allocation2], 4
      %s20 = int_to_ptr.vmem [resolvable:$true] %s19
      %22 = dma.hbm_to_vmem [thread:$0]  %s0, 512, %s20, [#allocation3]
    $region5: #{tpu_custom_call.1} parent=1 // pred_fallthru
      _
    // Predicated region
    $region6: #{tpu_custom_call.1} parent=1 // pred_check
      _
    $region7: #{tpu_custom_call.1} parent=1 // pred_check_branch
      %24 = sbr.rel (0) target = $region9
    $region8: #{tpu_custom_call.1} parent=1 // pred_region
      _
    $region9: #{tpu_custom_call.1} parent=1 // pred_fallthru
      _
    // Predicated region
    $region10: #{tpu_custom_call.1} parent=1 // pred_check
      _
    $region11: #{tpu_custom_call.1} parent=1 // pred_check_branch
      %26 = sbr.rel (0) target = $region13
    $region12: #{tpu_custom_call.1} parent=1 // pred_region
      _
    $region13: #{tpu_custom_call.1} parent=1 // pred_fallthru
      _
    // Predicated region
    $region14: #{tpu_custom_call.1} parent=1 // pred_check
      _
    $region15: #{tpu_custom_call.1} parent=1 // pred_check_branch
      %28 = sbr.rel (0) target = $region17
    $region16: #{tpu_custom_call.1} parent=1 // pred_region
      %s30 = ssub.s32 16384, 16384
      %31 = vsyncadd [#allocation6], %s30
      %s32 = sshll.u32 [#allocation5], 4
      %s33 = int_to_ptr.vmem [resolvable:$true] %s32
      %38 = dma.hbm_to_vmem [thread:$0]  %s3, 16384, %s33, [#allocation6], 256, 256, 16
    $region17: #{tpu_custom_call.1} parent=1 // pred_fallthru
      _
    // Predicated region
    $region18: #{tpu_custom_call.1} parent=1 // pred_check
      _
    $region19: #{tpu_custom_call.1} parent=1 // pred_check_branch
      %40 = sbr.rel (0) target = $region21
    $region20: #{tpu_custom_call.1} parent=1 // pred_region
      _
    $region21: #{tpu_custom_call.1} parent=1 // pred_fallthru
      _
    // Predicated region
    $region22: #{tpu_custom_call.1} parent=1 // pred_check
      _
    $region23: #{tpu_custom_call.1} parent=1 // pred_check_branch
      %42 = sbr.rel (0) target = $region25
    $region24: #{tpu_custom_call.1} parent=1 // pred_region
      %43 = dma.done [#allocation3], 512
    $region25: #{tpu_custom_call.1} parent=1 // pred_fallthru
      _
    // Predicated region
    $region26: #{tpu_custom_call.1} parent=1 // pred_check
      _
    $region27: #{tpu_custom_call.1} parent=1 // pred_check_branch
      %45 = sbr.rel (0) target = $region29
    $region28: #{tpu_custom_call.1} parent=1 // pred_region
      %46 = dma.done [#allocation6], 16384
    $region29: #{tpu_custom_call.1} parent=1 // pred_fallthru
      _
    %v47 = vld [vmem:[%s1] sm:$0x3]
    %v48 = vld [vmem:[#allocation2] sm:$0xff]
    %v49 = vld [vmem:[#allocation2 + $0x8] sm:$0xff]
    %v50 = vld [vmem:[#allocation2 + $0x10] sm:$0xff]
    %v51 = vld [vmem:[#allocation2 + $0x18] sm:$0xff]
    %v52 = vld [vmem:[%s2] sm:$0x3]
    %54 = vset.pattern.permute.xlu0 0
    %55 = vperm.xlu0 %54, %v52
    %v56 = vpop.permute.xlu0 %55
    %vm58 = vcmask 64512
    %v60 = vsel %vm58, %v47, 0
    %62 = vmatprep.subr.mxu0 0.0
    %63 = vmatpush1.msra.mxu0 0.0
    %64 = vmatprep.subr.mxu0 0.0
    %65 = vmatpush1.msra.mxu0 0.0
    %66 = vmatprep.subr.mxu0 0.0
    %67 = vmatpush1.msra.mxu0 0.0
    %68 = vmatprep.subr.mxu0 0.0
    %69 = vmatpush1.msra.mxu0 0.0
    %70 = vmatprep.subr.mxu0 0.0
    %71 = vmatpush1.msra.mxu0 0.0
    %72 = vmatprep.subr.mxu0 0.0
    %73 = vmatpush1.msra.mxu0 0.0
    %74 = vmatprep.subr.mxu0 0.0
    %75 = vmatpush1.msra.mxu0 0.0
    %76 = vmatprep.subr.mxu0 0.0
    %77 = vmatpush1.msra.mxu0 0.0
    %78 = vmatprep.subr.mxu0 0.0
    %79 = vmatpush1.msra.mxu0 0.0
    %80 = vmatprep.subr.mxu0 0.0
    %81 = vmatpush1.msra.mxu0 0.0
    %82 = vmatprep.subr.mxu0 0.0
    %83 = vmatpush1.msra.mxu0 0.0
    %84 = vmatprep.subr.mxu0 0.0
    %85 = vmatpush1.msra.mxu0 0.0
    %86 = vmatprep.subr.mxu0 0.0
    %87 = vmatpush1.msra.mxu0 0.0
    %88 = vmatprep.subr.mxu0 0.0
    %89 = vmatpush1.msra.mxu0 0.0
    %90 = vmatprep.subr.mxu0 0.0
    %91 = vmatpush1.msra.mxu0 0.0
    %92 = vmatprep.subr.mxu0 %v49
    %93 = vmatpush1.msra.mxu0 %v48
    %94 = vmatprep.subr.mxu0 0.0
    %95 = vmatpush2.msra.mxu0 0.0
    %96 = vmatprep.subr.mxu0 0.0
    %97 = vmatpush2.msra.mxu0 0.0
    %98 = vmatprep.subr.mxu0 0.0
    %99 = vmatpush2.msra.mxu0 0.0
    %100 = vmatprep.subr.mxu0 0.0
    %101 = vmatpush2.msra.mxu0 0.0
    %102 = vmatprep.subr.mxu0 0.0
    %103 = vmatpush2.msra.mxu0 0.0
    %104 = vmatprep.subr.mxu0 0.0
    %105 = vmatpush2.msra.mxu0 0.0
    %106 = vmatprep.subr.mxu0 0.0
    %107 = vmatpush2.msra.mxu0 0.0
    %108 = vmatprep.subr.mxu0 0.0
    %109 = vmatpush2.msra.mxu0 0.0
    %110 = vmatprep.subr.mxu0 0.0
    %111 = vmatpush2.msra.mxu0 0.0
    %112 = vmatprep.subr.mxu0 0.0
    %113 = vmatpush2.msra.mxu0 0.0
    %114 = vmatprep.subr.mxu0 0.0
    %115 = vmatpush2.msra.mxu0 0.0
    %116 = vmatprep.subr.mxu0 0.0
    %117 = vmatpush2.msra.mxu0 0.0
    %118 = vmatprep.subr.mxu0 0.0
    %119 = vmatpush2.msra.mxu0 0.0
    %120 = vmatprep.subr.mxu0 0.0
    %121 = vmatpush2.msra.mxu0 0.0
    %122 = vmatprep.subr.mxu0 0.0
    %123 = vmatpush2.msra.mxu0 0.0
    %124 = vmatprep.subr.mxu0 0.0
    %125 = vmatpush2.msra.mxu0 0.0
    %126 = vmatprep.mubr.f32.mxu0 0.0
    %127 = vmatmul.mubr.f32.gmra.mxu0 %v60
    %v128 = vpop.f32.mrf.mxu0
    %v129 = vadd.f32 %v56, %v128
    %v130 = vpop.f32.mrf.mxu0
    %v131 = vadd.f32 %v56, %v130
    %132 = vdwg.mxu0
    %133 = vmatprep.subr.mxu0 0.0
    %134 = vmatpush1.msra.mxu0 0.0
    %135 = vmatprep.subr.mxu0 0.0
    %136 = vmatpush1.msra.mxu0 0.0
    %137 = vmatprep.subr.mxu0 0.0
    %138 = vmatpush1.msra.mxu0 0.0
    %139 = vmatprep.subr.mxu0 0.0
    %140 = vmatpush1.msra.mxu0 0.0
    %141 = vmatprep.subr.mxu0 0.0
    %142 = vmatpush1.msra.mxu0 0.0
    %143 = vmatprep.subr.mxu0 0.0
    %144 = vmatpush1.msra.mxu0 0.0
    %145 = vmatprep.subr.mxu0 0.0
    %146 = vmatpush1.msra.mxu0 0.0
    %147 = vmatprep.subr.mxu0 0.0
    %148 = vmatpush1.msra.mxu0 0.0
    %149 = vmatprep.subr.mxu0 0.0
    %150 = vmatpush1.msra.mxu0 0.0
    %151 = vmatprep.subr.mxu0 0.0
    %152 = vmatpush1.msra.mxu0 0.0
    %153 = vmatprep.subr.mxu0 0.0
    %154 = vmatpush1.msra.mxu0 0.0
    %155 = vmatprep.subr.mxu0 0.0
    %156 = vmatpush1.msra.mxu0 0.0
    %157 = vmatprep.subr.mxu0 0.0
    %158 = vmatpush1.msra.mxu0 0.0
    %159 = vmatprep.subr.mxu0 0.0
    %160 = vmatpush1.msra.mxu0 0.0
    %161 = vmatprep.subr.mxu0 0.0
    %162 = vmatpush1.msra.mxu0 0.0
    %163 = vmatprep.subr.mxu0 %v51
    %164 = vmatpush1.msra.mxu0 %v50
    %165 = vmatprep.subr.mxu0 0.0
    %166 = vmatpush2.msra.mxu0 0.0
    %167 = vmatprep.subr.mxu0 0.0
    %168 = vmatpush2.msra.mxu0 0.0
    %169 = vmatprep.subr.mxu0 0.0
    %170 = vmatpush2.msra.mxu0 0.0
    %171 = vmatprep.subr.mxu0 0.0
    %172 = vmatpush2.msra.mxu0 0.0
    %173 = vmatprep.subr.mxu0 0.0
    %174 = vmatpush2.msra.mxu0 0.0
    %175 = vmatprep.subr.mxu0 0.0
    %176 = vmatpush2.msra.mxu0 0.0
    %177 = vmatprep.subr.mxu0 0.0
    %178 = vmatpush2.msra.mxu0 0.0
    %179 = vmatprep.subr.mxu0 0.0
    %180 = vmatpush2.msra.mxu0 0.0
    %181 = vmatprep.subr.mxu0 0.0
    %182 = vmatpush2.msra.mxu0 0.0
    %183 = vmatprep.subr.mxu0 0.0
    %184 = vmatpush2.msra.mxu0 0.0
    %185 = vmatprep.subr.mxu0 0.0
    %186 = vmatpush2.msra.mxu0 0.0
    %187 = vmatprep.subr.mxu0 0.0
    %188 = vmatpush2.msra.mxu0 0.0
    %189 = vmatprep.subr.mxu0 0.0
    %190 = vmatpush2.msra.mxu0 0.0
    %191 = vmatprep.subr.mxu0 0.0
    %192 = vmatpush2.msra.mxu0 0.0
    %193 = vmatprep.subr.mxu0 0.0
    %194 = vmatpush2.msra.mxu0 0.0
    %195 = vmatprep.subr.mxu0 0.0
    %196 = vmatpush2.msra.mxu0 0.0
    %197 = vmatprep.mubr.f32.mxu0 0.0
    %198 = vmatmul.mubr.f32.gmra.mxu0 %v60
    %v199 = vpop.f32.mrf.mxu0
    %v200 = vadd.f32 %v56, %v199
    %v201 = vpop.f32.mrf.mxu0
    %v202 = vadd.f32 %v56, %v201
    %203 = vdwg.mxu0
    %v204 = vmax.f32 %v129, 0.0
    %v205 = vmax.f32 %v131, 0.0
    %v206 = vmax.f32 %v200, 0.0
    %v207 = vmax.f32 %v202, 0.0
    %v208 = vld [vmem:[%s4] sm:$0x3]
    %v209 = vld [vmem:[#allocation5] sm:$0xff]
    %v210 = vld [vmem:[#allocation5 + $0x8] sm:$0xff]
    %v211 = vld [vmem:[#allocation5 + $0x10] sm:$0xff]
    %v212 = vld [vmem:[#allocation5 + $0x18] sm:$0xff]
    %v213 = vld [vmem:[#allocation5 + $0x20] sm:$0xff]
    %v214 = vld [vmem:[#allocation5 + $0x28] sm:$0xff]
    %v215 = vld [vmem:[#allocation5 + $0x30] sm:$0xff]
    %v216 = vld [vmem:[#allocation5 + $0x38] sm:$0xff]
    %v217 = vld [vmem:[#allocation5 + $0x40] sm:$0xff]
    %v218 = vld [vmem:[#allocation5 + $0x48] sm:$0xff]
    %v219 = vld [vmem:[#allocation5 + $0x50] sm:$0xff]
    %v220 = vld [vmem:[#allocation5 + $0x58] sm:$0xff]
    %v221 = vld [vmem:[#allocation5 + $0x60] sm:$0xff]
    %v222 = vld [vmem:[#allocation5 + $0x68] sm:$0xff]
    %v223 = vld [vmem:[#allocation5 + $0x70] sm:$0xff]
    %v224 = vld [vmem:[#allocation5 + $0x78] sm:$0xff]
    %v225 = vld [vmem:[#allocation5 + $0x80] sm:$0xff]
    %v226 = vld [vmem:[#allocation5 + $0x88] sm:$0xff]
    %v227 = vld [vmem:[#allocation5 + $0x90] sm:$0xff]
    %v228 = vld [vmem:[#allocation5 + $0x98] sm:$0xff]
    %v229 = vld [vmem:[#allocation5 + $0xa0] sm:$0xff]
    %v230 = vld [vmem:[#allocation5 + $0xa8] sm:$0xff]
    %v231 = vld [vmem:[#allocation5 + $0xb0] sm:$0xff]
    %v232 = vld [vmem:[#allocation5 + $0xb8] sm:$0xff]
    %v233 = vld [vmem:[#allocation5 + $0xc0] sm:$0xff]
    %v234 = vld [vmem:[#allocation5 + $0xc8] sm:$0xff]
    %v235 = vld [vmem:[#allocation5 + $0xd0] sm:$0xff]
    %v236 = vld [vmem:[#allocation5 + $0xd8] sm:$0xff]
    %v237 = vld [vmem:[#allocation5 + $0xe0] sm:$0xff]
    %v238 = vld [vmem:[#allocation5 + $0xe8] sm:$0xff]
    %v239 = vld [vmem:[#allocation5 + $0xf0] sm:$0xff]
    %v240 = vld [vmem:[#allocation5 + $0xf8] sm:$0xff]
    %v241 = vld [vmem:[#allocation5 + $0x100] sm:$0xff]
    %v242 = vld [vmem:[#allocation5 + $0x108] sm:$0xff]
    %v243 = vld [vmem:[#allocation5 + $0x110] sm:$0xff]
    %v244 = vld [vmem:[#allocation5 + $0x118] sm:$0xff]
    %v245 = vld [vmem:[#allocation5 + $0x120] sm:$0xff]
    %v246 = vld [vmem:[#allocation5 + $0x128] sm:$0xff]
    %v247 = vld [vmem:[#allocation5 + $0x130] sm:$0xff]
    %v248 = vld [vmem:[#allocation5 + $0x138] sm:$0xff]
    %v249 = vld [vmem:[#allocation5 + $0x140] sm:$0xff]
    %v250 = vld [vmem:[#allocation5 + $0x148] sm:$0xff]
    %v251 = vld [vmem:[#allocation5 + $0x150] sm:$0xff]
    %v252 = vld [vmem:[#allocation5 + $0x158] sm:$0xff]
    %v253 = vld [vmem:[#allocation5 + $0x160] sm:$0xff]
    %v254 = vld [vmem:[#allocation5 + $0x168] sm:$0xff]
    %v255 = vld [vmem:[#allocation5 + $0x170] sm:$0xff]
    %v256 = vld [vmem:[#allocation5 + $0x178] sm:$0xff]
    %v257 = vld [vmem:[#allocation5 + $0x180] sm:$0xff]
    %v258 = vld [vmem:[#allocation5 + $0x188] sm:$0xff]
    %v259 = vld [vmem:[#allocation5 + $0x190] sm:$0xff]
    %v260 = vld [vmem:[#allocation5 + $0x198] sm:$0xff]
    %v261 = vld [vmem:[#allocation5 + $0x1a0] sm:$0xff]
    %v262 = vld [vmem:[#allocation5 + $0x1a8] sm:$0xff]
    %v263 = vld [vmem:[#allocation5 + $0x1b0] sm:$0xff]
    %v264 = vld [vmem:[#allocation5 + $0x1b8] sm:$0xff]
    %v265 = vld [vmem:[#allocation5 + $0x1c0] sm:$0xff]
    %v266 = vld [vmem:[#allocation5 + $0x1c8] sm:$0xff]
    %v267 = vld [vmem:[#allocation5 + $0x1d0] sm:$0xff]
    %v268 = vld [vmem:[#allocation5 + $0x1d8] sm:$0xff]
    %v269 = vld [vmem:[#allocation5 + $0x1e0] sm:$0xff]
    %v270 = vld [vmem:[#allocation5 + $0x1e8] sm:$0xff]
    %v271 = vld [vmem:[#allocation5 + $0x1f0] sm:$0xff]
    %v272 = vld [vmem:[#allocation5 + $0x1f8] sm:$0xff]
    %273 = vmatprep.subr.mxu0 %v240
    %274 = vmatpush1.msra.mxu0 %v239
    %275 = vmatprep.subr.mxu0 %v238
    %276 = vmatpush1.msra.mxu0 %v237
    %277 = vmatprep.subr.mxu0 %v236
    %278 = vmatpush1.msra.mxu0 %v235
    %279 = vmatprep.subr.mxu0 %v234
    %280 = vmatpush1.msra.mxu0 %v233
    %281 = vmatprep.subr.mxu0 %v232
    %282 = vmatpush1.msra.mxu0 %v231
    %283 = vmatprep.subr.mxu0 %v230
    %284 = vmatpush1.msra.mxu0 %v229
    %285 = vmatprep.subr.mxu0 %v228
    %286 = vmatpush1.msra.mxu0 %v227
    %287 = vmatprep.subr.mxu0 %v226
    %288 = vmatpush1.msra.mxu0 %v225
    %289 = vmatprep.subr.mxu0 %v224
    %290 = vmatpush1.msra.mxu0 %v223
    %291 = vmatprep.subr.mxu0 %v222
    %292 = vmatpush1.msra.mxu0 %v221
    %293 = vmatprep.subr.mxu0 %v220
    %294 = vmatpush1.msra.mxu0 %v219
    %295 = vmatprep.subr.mxu0 %v218
    %296 = vmatpush1.msra.mxu0 %v217
    %297 = vmatprep.subr.mxu0 %v216
    %298 = vmatpush1.msra.mxu0 %v215
    %299 = vmatprep.subr.mxu0 %v214
    %300 = vmatpush1.msra.mxu0 %v213
    %301 = vmatprep.subr.mxu0 %v212
    %302 = vmatpush1.msra.mxu0 %v211
    %303 = vmatprep.subr.mxu0 %v210
    %304 = vmatpush1.msra.mxu0 %v209
    %305 = vmatprep.subr.mxu0 %v272
    %306 = vmatpush2.msra.mxu0 %v271
    %307 = vmatprep.subr.mxu0 %v270
    %308 = vmatpush2.msra.mxu0 %v269
    %309 = vmatprep.subr.mxu0 %v268
    %310 = vmatpush2.msra.mxu0 %v267
    %311 = vmatprep.subr.mxu0 %v266
    %312 = vmatpush2.msra.mxu0 %v265
    %313 = vmatprep.subr.mxu0 %v264
    %314 = vmatpush2.msra.mxu0 %v263
    %315 = vmatprep.subr.mxu0 %v262
    %316 = vmatpush2.msra.mxu0 %v261
    %317 = vmatprep.subr.mxu0 %v260
    %318 = vmatpush2.msra.mxu0 %v259
    %319 = vmatprep.subr.mxu0 %v258
    %320 = vmatpush2.msra.mxu0 %v257
    %321 = vmatprep.subr.mxu0 %v256
    %322 = vmatpush2.msra.mxu0 %v255
    %323 = vmatprep.subr.mxu0 %v254
    %324 = vmatpush2.msra.mxu0 %v253
    %325 = vmatprep.subr.mxu0 %v252
    %326 = vmatpush2.msra.mxu0 %v251
    %327 = vmatprep.subr.mxu0 %v250
    %328 = vmatpush2.msra.mxu0 %v249
    %329 = vmatprep.subr.mxu0 %v248
    %330 = vmatpush2.msra.mxu0 %v247
    %331 = vmatprep.subr.mxu0 %v246
    %332 = vmatpush2.msra.mxu0 %v245
    %333 = vmatprep.subr.mxu0 %v244
    %334 = vmatpush2.msra.mxu0 %v243
    %335 = vmatprep.subr.mxu0 %v242
    %336 = vmatpush2.msra.mxu0 %v241
    %337 = vmatprep.mubr.f32.mxu0 %v205
    %338 = vmatmul.mubr.f32.gmra.mxu0 %v204
    %v339 = vpop.f32.mrf.mxu0
    %v340 = vadd.f32 0.0, %v339
    %v341 = vpop.f32.mrf.mxu0
    %v342 = vadd.f32 0.0, %v341
    %343 = vdwg.mxu0
    %v346 = vcombine.low %v340, %v342
    %v348 = vunpack.c.l.s4 1966171168
    %v349 = vunpack.c.0.s8 %v348
    %v350 = vlaneseq
    %v351 = vshrl.u32 %v350, 7
    %v352 = vsub.s32 %v349, %v351
    %v353 = vrot.slane %v346, %v352
    %v355 = vunpack.c.l.s4 1966171168
    %v356 = vunpack.c.0.s8 %v355
    %v357 = vlaneseq
    %v358 = vshrl.u32 %v357, 7
    %v359 = vsub.s32 %v356, %v358
    %v360 = vrot.slane %v353, %v359
    %v362 = vadd.f32 %v208, %v360
    %v363 = vld [vmem:[#allocation5 + $0x200] sm:$0xff]
    %v364 = vld [vmem:[#allocation5 + $0x208] sm:$0xff]
    %v365 = vld [vmem:[#allocation5 + $0x210] sm:$0xff]
    %v366 = vld [vmem:[#allocation5 + $0x218] sm:$0xff]
    %v367 = vld [vmem:[#allocation5 + $0x220] sm:$0xff]
    %v368 = vld [vmem:[#allocation5 + $0x228] sm:$0xff]
    %v369 = vld [vmem:[#allocation5 + $0x230] sm:$0xff]
    %v370 = vld [vmem:[#allocation5 + $0x238] sm:$0xff]
    %v371 = vld [vmem:[#allocation5 + $0x240] sm:$0xff]
    %v372 = vld [vmem:[#allocation5 + $0x248] sm:$0xff]
    %v373 = vld [vmem:[#allocation5 + $0x250] sm:$0xff]
    %v374 = vld [vmem:[#allocation5 + $0x258] sm:$0xff]
    %v375 = vld [vmem:[#allocation5 + $0x260] sm:$0xff]
    %v376 = vld [vmem:[#allocation5 + $0x268] sm:$0xff]
    %v377 = vld [vmem:[#allocation5 + $0x270] sm:$0xff]
    %v378 = vld [vmem:[#allocation5 + $0x278] sm:$0xff]
    %v379 = vld [vmem:[#allocation5 + $0x280] sm:$0xff]
    %v380 = vld [vmem:[#allocation5 + $0x288] sm:$0xff]
    %v381 = vld [vmem:[#allocation5 + $0x290] sm:$0xff]
    %v382 = vld [vmem:[#allocation5 + $0x298] sm:$0xff]
    %v383 = vld [vmem:[#allocation5 + $0x2a0] sm:$0xff]
    %v384 = vld [vmem:[#allocation5 + $0x2a8] sm:$0xff]
    %v385 = vld [vmem:[#allocation5 + $0x2b0] sm:$0xff]
    %v386 = vld [vmem:[#allocation5 + $0x2b8] sm:$0xff]
    %v387 = vld [vmem:[#allocation5 + $0x2c0] sm:$0xff]
    %v388 = vld [vmem:[#allocation5 + $0x2c8] sm:$0xff]
    %v389 = vld [vmem:[#allocation5 + $0x2d0] sm:$0xff]
    %v390 = vld [vmem:[#allocation5 + $0x2d8] sm:$0xff]
    %v391 = vld [vmem:[#allocation5 + $0x2e0] sm:$0xff]
    %v392 = vld [vmem:[#allocation5 + $0x2e8] sm:$0xff]
    %v393 = vld [vmem:[#allocation5 + $0x2f0] sm:$0xff]
    %v394 = vld [vmem:[#allocation5 + $0x2f8] sm:$0xff]
    %v395 = vld [vmem:[#allocation5 + $0x300] sm:$0xff]
    %v396 = vld [vmem:[#allocation5 + $0x308] sm:$0xff]
    %v397 = vld [vmem:[#allocation5 + $0x310] sm:$0xff]
    %v398 = vld [vmem:[#allocation5 + $0x318] sm:$0xff]
    %v399 = vld [vmem:[#allocation5 + $0x320] sm:$0xff]
    %v400 = vld [vmem:[#allocation5 + $0x328] sm:$0xff]
    %v401 = vld [vmem:[#allocation5 + $0x330] sm:$0xff]
    %v402 = vld [vmem:[#allocation5 + $0x338] sm:$0xff]
    %v403 = vld [vmem:[#allocation5 + $0x340] sm:$0xff]
    %v404 = vld [vmem:[#allocation5 + $0x348] sm:$0xff]
    %v405 = vld [vmem:[#allocation5 + $0x350] sm:$0xff]
    %v406 = vld [vmem:[#allocation5 + $0x358] sm:$0xff]
    %v407 = vld [vmem:[#allocation5 + $0x360] sm:$0xff]
    %v408 = vld [vmem:[#allocation5 + $0x368] sm:$0xff]
    %v409 = vld [vmem:[#allocation5 + $0x370] sm:$0xff]
    %v410 = vld [vmem:[#allocation5 + $0x378] sm:$0xff]
    %v411 = vld [vmem:[#allocation5 + $0x380] sm:$0xff]
    %v412 = vld [vmem:[#allocation5 + $0x388] sm:$0xff]
    %v413 = vld [vmem:[#allocation5 + $0x390] sm:$0xff]
    %v414 = vld [vmem:[#allocation5 + $0x398] sm:$0xff]
    %v415 = vld [vmem:[#allocation5 + $0x3a0] sm:$0xff]
    %v416 = vld [vmem:[#allocation5 + $0x3a8] sm:$0xff]
    %v417 = vld [vmem:[#allocation5 + $0x3b0] sm:$0xff]
    %v418 = vld [vmem:[#allocation5 + $0x3b8] sm:$0xff]
    %v419 = vld [vmem:[#allocation5 + $0x3c0] sm:$0xff]
    %v420 = vld [vmem:[#allocation5 + $0x3c8] sm:$0xff]
    %v421 = vld [vmem:[#allocation5 + $0x3d0] sm:$0xff]
    %v422 = vld [vmem:[#allocation5 + $0x3d8] sm:$0xff]
    %v423 = vld [vmem:[#allocation5 + $0x3e0] sm:$0xff]
    %v424 = vld [vmem:[#allocation5 + $0x3e8] sm:$0xff]
    %v425 = vld [vmem:[#allocation5 + $0x3f0] sm:$0xff]
    %v426 = vld [vmem:[#allocation5 + $0x3f8] sm:$0xff]
    %v429 = vrot.slane %v204, 1
    %v430 = vrot.slane %v205, 1
    %433 = vmatprep.subr.mxu0 %v394
    %434 = vmatpush1.msra.mxu0 %v393
    %435 = vmatprep.subr.mxu0 %v392
    %436 = vmatpush1.msra.mxu0 %v391
    %437 = vmatprep.subr.mxu0 %v390
    %438 = vmatpush1.msra.mxu0 %v389
    %439 = vmatprep.subr.mxu0 %v388
    %440 = vmatpush1.msra.mxu0 %v387
    %441 = vmatprep.subr.mxu0 %v386
    %442 = vmatpush1.msra.mxu0 %v385
    %443 = vmatprep.subr.mxu0 %v384
    %444 = vmatpush1.msra.mxu0 %v383
    %445 = vmatprep.subr.mxu0 %v382
    %446 = vmatpush1.msra.mxu0 %v381
    %447 = vmatprep.subr.mxu0 %v380
    %448 = vmatpush1.msra.mxu0 %v379
    %449 = vmatprep.subr.mxu0 %v378
    %450 = vmatpush1.msra.mxu0 %v377
    %451 = vmatprep.subr.mxu0 %v376
    %452 = vmatpush1.msra.mxu0 %v375
    %453 = vmatprep.subr.mxu0 %v374
    %454 = vmatpush1.msra.mxu0 %v373
    %455 = vmatprep.subr.mxu0 %v372
    %456 = vmatpush1.msra.mxu0 %v371
    %457 = vmatprep.subr.mxu0 %v370
    %458 = vmatpush1.msra.mxu0 %v369
    %459 = vmatprep.subr.mxu0 %v368
    %460 = vmatpush1.msra.mxu0 %v367
    %461 = vmatprep.subr.mxu0 %v366
    %462 = vmatpush1.msra.mxu0 %v365
    %463 = vmatprep.subr.mxu0 %v364
    %464 = vmatpush1.msra.mxu0 %v363
    %465 = vmatprep.subr.mxu0 %v426
    %466 = vmatpush2.msra.mxu0 %v425
    %467 = vmatprep.subr.mxu0 %v424
    %468 = vmatpush2.msra.mxu0 %v423
    %469 = vmatprep.subr.mxu0 %v422
    %470 = vmatpush2.msra.mxu0 %v421
    %471 = vmatprep.subr.mxu0 %v420
    %472 = vmatpush2.msra.mxu0 %v419
    %473 = vmatprep.subr.mxu0 %v418
    %474 = vmatpush2.msra.mxu0 %v417
    %475 = vmatprep.subr.mxu0 %v416
    %476 = vmatpush2.msra.mxu0 %v415
    %477 = vmatprep.subr.mxu0 %v414
    %478 = vmatpush2.msra.mxu0 %v413
    %479 = vmatprep.subr.mxu0 %v412
    %480 = vmatpush2.msra.mxu0 %v411
    %481 = vmatprep.subr.mxu0 %v410
    %482 = vmatpush2.msra.mxu0 %v409
    %483 = vmatprep.subr.mxu0 %v408
    %484 = vmatpush2.msra.mxu0 %v407
    %485 = vmatprep.subr.mxu0 %v406
    %486 = vmatpush2.msra.mxu0 %v405
    %487 = vmatprep.subr.mxu0 %v404
    %488 = vmatpush2.msra.mxu0 %v403
    %489 = vmatprep.subr.mxu0 %v402
    %490 = vmatpush2.msra.mxu0 %v401
    %491 = vmatprep.subr.mxu0 %v400
    %492 = vmatpush2.msra.mxu0 %v399
    %493 = vmatprep.subr.mxu0 %v398
    %494 = vmatpush2.msra.mxu0 %v397
    %495 = vmatprep.subr.mxu0 %v396
    %496 = vmatpush2.msra.mxu0 %v395
    %497 = vmatprep.mubr.f32.mxu0 %v430
    %498 = vmatmul.mubr.f32.gmra.mxu0 %v429
    %v499 = vpop.f32.mrf.mxu0
    %v500 = vadd.f32 0.0, %v499
    %v501 = vpop.f32.mrf.mxu0
    %v502 = vadd.f32 0.0, %v501
    %503 = vdwg.mxu0
    %v506 = vcombine.low %v500, %v502
    %v508 = vunpack.c.l.s4 1966171168
    %v509 = vunpack.c.0.s8 %v508
    %v510 = vlaneseq
    %v511 = vshrl.u32 %v510, 7
    %v512 = vsub.s32 %v509, %v511
    %v513 = vrot.slane %v506, %v512
    %v515 = vunpack.c.l.s4 1966171168
    %v516 = vunpack.c.0.s8 %v515
    %v517 = vlaneseq
    %v518 = vshrl.u32 %v517, 7
    %v519 = vsub.s32 %v516, %v518
    %v520 = vrot.slane %v513, %v519
    %v522 = vadd.f32 %v362, %v520
    %v524 = vlaneseq
    %v525 = vshrl.u32 %v524, 7
    %v526 = vsub.s32 0, %v525
    %v527 = vrot.slane %v522, %v526
    %v528 = vlaneseq
    %v529 = vshrl.u32 %v528, 7
    %v530 = vsub.s32 1, %v529
    %v531 = vrot.slane %v522, %v530
    %vm534 = vcmask 1040384
    %v535 = vsel %vm534, %v527, -inf
    %v536 = vsel %vm534, %v531, -inf
    %v537 = vmax.f32 %v535, %v536
    %538 = vmax.xlane.f32.xlu0 %v537
    %v539 = vpop.xlane.xlu0 %538
    %v541 = vlaneseq
    %v542 = vshrl.u32 %v541, 7
    %v543 = vsub.s32 0, %v542
    %v544 = vrot.slane %v539, %v543
    %v546 = vsub.f32 %v522, %v544
    %v547 = vmul.f32 %v546, 1.442695
    %v548 = vpow.pop %v547
    %v550 = vlaneseq
    %v551 = vshrl.u32 %v550, 7
    %v552 = vsub.s32 0, %v551
    %v553 = vrot.slane %v548, %v552
    %v554 = vlaneseq
    %v555 = vshrl.u32 %v554, 7
    %v556 = vsub.s32 1, %v555
    %v557 = vrot.slane %v548, %v556
    %v560 = vsel %vm534, %v553, 0.0
    %v561 = vsel %vm534, %v557, 0.0
    %v562 = vadd.f32 %v560, %v561
    %563 = vadd.xlane.f32.xlu0 %v562
    %v564 = vpop.xlane.xlu0 %563
    %v565 = vlog2.pop %v564
    %v566 = vmul.f32 %v565, 0.6931472
    %v568 = vlaneseq
    %v569 = vshrl.u32 %v568, 7
    %v570 = vsub.s32 0, %v569
    %v571 = vrot.slane %v566, %v570
    %v573 = vsub.f32 %v546, %v571
    %v574 = vlaneseq
    %vm575 = vcmp.ge.s32.totalorder %v574, 0
    %vm576 = vcmp.lt.s32.totalorder %v574, 256
    %vm577 = vmand %vm575, %vm576
    %578 = vst.msk [vmem:[#allocation7] ss:$2 sm:$0x3] %vm577, %v573
    %v579 = vld [vmem:[%s4] sm:$0x3]
    %v580 = vld [vmem:[#allocation5] sm:$0xff]
    %v581 = vld [vmem:[#allocation5 + $0x8] sm:$0xff]
    %v582 = vld [vmem:[#allocation5 + $0x10] sm:$0xff]
    %v583 = vld [vmem:[#allocation5 + $0x18] sm:$0xff]
    %v584 = vld [vmem:[#allocation5 + $0x20] sm:$0xff]
    %v585 = vld [vmem:[#allocation5 + $0x28] sm:$0xff]
    %v586 = vld [vmem:[#allocation5 + $0x30] sm:$0xff]
    %v587 = vld [vmem:[#allocation5 + $0x38] sm:$0xff]
    %v588 = vld [vmem:[#allocation5 + $0x40] sm:$0xff]
    %v589 = vld [vmem:[#allocation5 + $0x48] sm:$0xff]
    %v590 = vld [vmem:[#allocation5 + $0x50] sm:$0xff]
    %v591 = vld [vmem:[#allocation5 + $0x58] sm:$0xff]
    %v592 = vld [vmem:[#allocation5 + $0x60] sm:$0xff]
    %v593 = vld [vmem:[#allocation5 + $0x68] sm:$0xff]
    %v594 = vld [vmem:[#allocation5 + $0x70] sm:$0xff]
    %v595 = vld [vmem:[#allocation5 + $0x78] sm:$0xff]
    %v596 = vld [vmem:[#allocation5 + $0x80] sm:$0xff]
    %v597 = vld [vmem:[#allocation5 + $0x88] sm:$0xff]
    %v598 = vld [vmem:[#allocation5 + $0x90] sm:$0xff]
    %v599 = vld [vmem:[#allocation5 + $0x98] sm:$0xff]
    %v600 = vld [vmem:[#allocation5 + $0xa0] sm:$0xff]
    %v601 = vld [vmem:[#allocation5 + $0xa8] sm:$0xff]
    %v602 = vld [vmem:[#allocation5 + $0xb0] sm:$0xff]
    %v603 = vld [vmem:[#allocation5 + $0xb8] sm:$0xff]
    %v604 = vld [vmem:[#allocation5 + $0xc0] sm:$0xff]
    %v605 = vld [vmem:[#allocation5 + $0xc8] sm:$0xff]
    %v606 = vld [vmem:[#allocation5 + $0xd0] sm:$0xff]
    %v607 = vld [vmem:[#allocation5 + $0xd8] sm:$0xff]
    %v608 = vld [vmem:[#allocation5 + $0xe0] sm:$0xff]
    %v609 = vld [vmem:[#allocation5 + $0xe8] sm:$0xff]
    %v610 = vld [vmem:[#allocation5 + $0xf0] sm:$0xff]
    %v611 = vld [vmem:[#allocation5 + $0xf8] sm:$0xff]
    %v612 = vld [vmem:[#allocation5 + $0x100] sm:$0xff]
    %v613 = vld [vmem:[#allocation5 + $0x108] sm:$0xff]
    %v614 = vld [vmem:[#allocation5 + $0x110] sm:$0xff]
    %v615 = vld [vmem:[#allocation5 + $0x118] sm:$0xff]
    %v616 = vld [vmem:[#allocation5 + $0x120] sm:$0xff]
    %v617 = vld [vmem:[#allocation5 + $0x128] sm:$0xff]
    %v618 = vld [vmem:[#allocation5 + $0x130] sm:$0xff]
    %v619 = vld [vmem:[#allocation5 + $0x138] sm:$0xff]
    %v620 = vld [vmem:[#allocation5 + $0x140] sm:$0xff]
    %v621 = vld [vmem:[#allocation5 + $0x148] sm:$0xff]
    %v622 = vld [vmem:[#allocation5 + $0x150] sm:$0xff]
    %v623 = vld [vmem:[#allocation5 + $0x158] sm:$0xff]
    %v624 = vld [vmem:[#allocation5 + $0x160] sm:$0xff]
    %v625 = vld [vmem:[#allocation5 + $0x168] sm:$0xff]
    %v626 = vld [vmem:[#allocation5 + $0x170] sm:$0xff]
    %v627 = vld [vmem:[#allocation5 + $0x178] sm:$0xff]
    %v628 = vld [vmem:[#allocation5 + $0x180] sm:$0xff]
    %v629 = vld [vmem:[#allocation5 + $0x188] sm:$0xff]
    %v630 = vld [vmem:[#allocation5 + $0x190] sm:$0xff]
    %v631 = vld [vmem:[#allocation5 + $0x198] sm:$0xff]
    %v632 = vld [vmem:[#allocation5 + $0x1a0] sm:$0xff]
    %v633 = vld [vmem:[#allocation5 + $0x1a8] sm:$0xff]
    %v634 = vld [vmem:[#allocation5 + $0x1b0] sm:$0xff]
    %v635 = vld [vmem:[#allocation5 + $0x1b8] sm:$0xff]
    %v636 = vld [vmem:[#allocation5 + $0x1c0] sm:$0xff]
    %v637 = vld [vmem:[#allocation5 + $0x1c8] sm:$0xff]
    %v638 = vld [vmem:[#allocation5 + $0x1d0] sm:$0xff]
    %v639 = vld [vmem:[#allocation5 + $0x1d8] sm:$0xff]
    %v640 = vld [vmem:[#allocation5 + $0x1e0] sm:$0xff]
    %v641 = vld [vmem:[#allocation5 + $0x1e8] sm:$0xff]
    %v642 = vld [vmem:[#allocation5 + $0x1f0] sm:$0xff]
    %v643 = vld [vmem:[#allocation5 + $0x1f8] sm:$0xff]
    %644 = vmatprep.subr.mxu0 %v611
    %645 = vmatpush1.msra.mxu0 %v610
    %646 = vmatprep.subr.mxu0 %v609
    %647 = vmatpush1.msra.mxu0 %v608
    %648 = vmatprep.subr.mxu0 %v607
    %649 = vmatpush1.msra.mxu0 %v606
    %650 = vmatprep.subr.mxu0 %v605
    %651 = vmatpush1.msra.mxu0 %v604
    %652 = vmatprep.subr.mxu0 %v603
    %653 = vmatpush1.msra.mxu0 %v602
    %654 = vmatprep.subr.mxu0 %v601
    %655 = vmatpush1.msra.mxu0 %v600
    %656 = vmatprep.subr.mxu0 %v599
    %657 = vmatpush1.msra.mxu0 %v598
    %658 = vmatprep.subr.mxu0 %v597
    %659 = vmatpush1.msra.mxu0 %v596
    %660 = vmatprep.subr.mxu0 %v595
    %661 = vmatpush1.msra.mxu0 %v594
    %662 = vmatprep.subr.mxu0 %v593
    %663 = vmatpush1.msra.mxu0 %v592
    %664 = vmatprep.subr.mxu0 %v591
    %665 = vmatpush1.msra.mxu0 %v590
    %666 = vmatprep.subr.mxu0 %v589
    %667 = vmatpush1.msra.mxu0 %v588
    %668 = vmatprep.subr.mxu0 %v587
    %669 = vmatpush1.msra.mxu0 %v586
    %670 = vmatprep.subr.mxu0 %v585
    %671 = vmatpush1.msra.mxu0 %v584
    %672 = vmatprep.subr.mxu0 %v583
    %673 = vmatpush1.msra.mxu0 %v582
    %674 = vmatprep.subr.mxu0 %v581
    %675 = vmatpush1.msra.mxu0 %v580
    %676 = vmatprep.subr.mxu0 %v643
    %677 = vmatpush2.msra.mxu0 %v642
    %678 = vmatprep.subr.mxu0 %v641
    %679 = vmatpush2.msra.mxu0 %v640
    %680 = vmatprep.subr.mxu0 %v639
    %681 = vmatpush2.msra.mxu0 %v638
    %682 = vmatprep.subr.mxu0 %v637
    %683 = vmatpush2.msra.mxu0 %v636
    %684 = vmatprep.subr.mxu0 %v635
    %685 = vmatpush2.msra.mxu0 %v634
    %686 = vmatprep.subr.mxu0 %v633
    %687 = vmatpush2.msra.mxu0 %v632
    %688 = vmatprep.subr.mxu0 %v631
    %689 = vmatpush2.msra.mxu0 %v630
    %690 = vmatprep.subr.mxu0 %v629
    %691 = vmatpush2.msra.mxu0 %v628
    %692 = vmatprep.subr.mxu0 %v627
    %693 = vmatpush2.msra.mxu0 %v626
    %694 = vmatprep.subr.mxu0 %v625
    %695 = vmatpush2.msra.mxu0 %v624
    %696 = vmatprep.subr.mxu0 %v623
    %697 = vmatpush2.msra.mxu0 %v622
    %698 = vmatprep.subr.mxu0 %v621
    %699 = vmatpush2.msra.mxu0 %v620
    %700 = vmatprep.subr.mxu0 %v619
    %701 = vmatpush2.msra.mxu0 %v618
    %702 = vmatprep.subr.mxu0 %v617
    %703 = vmatpush2.msra.mxu0 %v616
    %704 = vmatprep.subr.mxu0 %v615
    %705 = vmatpush2.msra.mxu0 %v614
    %706 = vmatprep.subr.mxu0 %v613
    %707 = vmatpush2.msra.mxu0 %v612
    %708 = vmatprep.mubr.f32.mxu0 %v207
    %709 = vmatmul.mubr.f32.gmra.mxu0 %v206
    %v710 = vpop.f32.mrf.mxu0
    %v711 = vadd.f32 0.0, %v710
    %v712 = vpop.f32.mrf.mxu0
    %v713 = vadd.f32 0.0, %v712
    %714 = vdwg.mxu0
    %v717 = vcombine.low %v711, %v713
    %v719 = vunpack.c.l.s4 1966171168
    %v720 = vunpack.c.0.s8 %v719
    %v721 = vlaneseq
    %v722 = vshrl.u32 %v721, 7
    %v723 = vsub.s32 %v720, %v722
    %v724 = vrot.slane %v717, %v723
    %v726 = vunpack.c.l.s4 1966171168
    %v727 = vunpack.c.0.s8 %v726
    %v728 = vlaneseq
    %v729 = vshrl.u32 %v728, 7
    %v730 = vsub.s32 %v727, %v729
    %v731 = vrot.slane %v724, %v730
    %v733 = vadd.f32 %v579, %v731
    %v734 = vld [vmem:[#allocation5 + $0x200] sm:$0xff]
    %v735 = vld [vmem:[#allocation5 + $0x208] sm:$0xff]
    %v736 = vld [vmem:[#allocation5 + $0x210] sm:$0xff]
    %v737 = vld [vmem:[#allocation5 + $0x218] sm:$0xff]
    %v738 = vld [vmem:[#allocation5 + $0x220] sm:$0xff]
    %v739 = vld [vmem:[#allocation5 + $0x228] sm:$0xff]
    %v740 = vld [vmem:[#allocation5 + $0x230] sm:$0xff]
    %v741 = vld [vmem:[#allocation5 + $0x238] sm:$0xff]
    %v742 = vld [vmem:[#allocation5 + $0x240] sm:$0xff]
    %v743 = vld [vmem:[#allocation5 + $0x248] sm:$0xff]
    %v744 = vld [vmem:[#allocation5 + $0x250] sm:$0xff]
    %v745 = vld [vmem:[#allocation5 + $0x258] sm:$0xff]
    %v746 = vld [vmem:[#allocation5 + $0x260] sm:$0xff]
    %v747 = vld [vmem:[#allocation5 + $0x268] sm:$0xff]
    %v748 = vld [vmem:[#allocation5 + $0x270] sm:$0xff]
    %v749 = vld [vmem:[#allocation5 + $0x278] sm:$0xff]
    %v750 = vld [vmem:[#allocation5 + $0x280] sm:$0xff]
    %v751 = vld [vmem:[#allocation5 + $0x288] sm:$0xff]
    %v752 = vld [vmem:[#allocation5 + $0x290] sm:$0xff]
    %v753 = vld [vmem:[#allocation5 + $0x298] sm:$0xff]
    %v754 = vld [vmem:[#allocation5 + $0x2a0] sm:$0xff]
    %v755 = vld [vmem:[#allocation5 + $0x2a8] sm:$0xff]
    %v756 = vld [vmem:[#allocation5 + $0x2b0] sm:$0xff]
    %v757 = vld [vmem:[#allocation5 + $0x2b8] sm:$0xff]
    %v758 = vld [vmem:[#allocation5 + $0x2c0] sm:$0xff]
    %v759 = vld [vmem:[#allocation5 + $0x2c8] sm:$0xff]
    %v760 = vld [vmem:[#allocation5 + $0x2d0] sm:$0xff]
    %v761 = vld [vmem:[#allocation5 + $0x2d8] sm:$0xff]
    %v762 = vld [vmem:[#allocation5 + $0x2e0] sm:$0xff]
    %v763 = vld [vmem:[#allocation5 + $0x2e8] sm:$0xff]
    %v764 = vld [vmem:[#allocation5 + $0x2f0] sm:$0xff]
    %v765 = vld [vmem:[#allocation5 + $0x2f8] sm:$0xff]
    %v766 = vld [vmem:[#allocation5 + $0x300] sm:$0xff]
    %v767 = vld [vmem:[#allocation5 + $0x308] sm:$0xff]
    %v768 = vld [vmem:[#allocation5 + $0x310] sm:$0xff]
    %v769 = vld [vmem:[#allocation5 + $0x318] sm:$0xff]
    %v770 = vld [vmem:[#allocation5 + $0x320] sm:$0xff]
    %v771 = vld [vmem:[#allocation5 + $0x328] sm:$0xff]
    %v772 = vld [vmem:[#allocation5 + $0x330] sm:$0xff]
    %v773 = vld [vmem:[#allocation5 + $0x338] sm:$0xff]
    %v774 = vld [vmem:[#allocation5 + $0x340] sm:$0xff]
    %v775 = vld [vmem:[#allocation5 + $0x348] sm:$0xff]
    %v776 = vld [vmem:[#allocation5 + $0x350] sm:$0xff]
    %v777 = vld [vmem:[#allocation5 + $0x358] sm:$0xff]
    %v778 = vld [vmem:[#allocation5 + $0x360] sm:$0xff]
    %v779 = vld [vmem:[#allocation5 + $0x368] sm:$0xff]
    %v780 = vld [vmem:[#allocation5 + $0x370] sm:$0xff]
    %v781 = vld [vmem:[#allocation5 + $0x378] sm:$0xff]
    %v782 = vld [vmem:[#allocation5 + $0x380] sm:$0xff]
    %v783 = vld [vmem:[#allocation5 + $0x388] sm:$0xff]
    %v784 = vld [vmem:[#allocation5 + $0x390] sm:$0xff]
    %v785 = vld [vmem:[#allocation5 + $0x398] sm:$0xff]
    %v786 = vld [vmem:[#allocation5 + $0x3a0] sm:$0xff]
    %v787 = vld [vmem:[#allocation5 + $0x3a8] sm:$0xff]
    %v788 = vld [vmem:[#allocation5 + $0x3b0] sm:$0xff]
    %v789 = vld [vmem:[#allocation5 + $0x3b8] sm:$0xff]
    %v790 = vld [vmem:[#allocation5 + $0x3c0] sm:$0xff]
    %v791 = vld [vmem:[#allocation5 + $0x3c8] sm:$0xff]
    %v792 = vld [vmem:[#allocation5 + $0x3d0] sm:$0xff]
    %v793 = vld [vmem:[#allocation5 + $0x3d8] sm:$0xff]
    %v794 = vld [vmem:[#allocation5 + $0x3e0] sm:$0xff]
    %v795 = vld [vmem:[#allocation5 + $0x3e8] sm:$0xff]
    %v796 = vld [vmem:[#allocation5 + $0x3f0] sm:$0xff]
    %v797 = vld [vmem:[#allocation5 + $0x3f8] sm:$0xff]
    %v800 = vrot.slane %v206, 1
    %v801 = vrot.slane %v207, 1
    %804 = vmatprep.subr.mxu0 %v765
    %805 = vmatpush1.msra.mxu0 %v764
    %806 = vmatprep.subr.mxu0 %v763
    %807 = vmatpush1.msra.mxu0 %v762
    %808 = vmatprep.subr.mxu0 %v761
    %809 = vmatpush1.msra.mxu0 %v760
    %810 = vmatprep.subr.mxu0 %v759
    %811 = vmatpush1.msra.mxu0 %v758
    %812 = vmatprep.subr.mxu0 %v757
    %813 = vmatpush1.msra.mxu0 %v756
    %814 = vmatprep.subr.mxu0 %v755
    %815 = vmatpush1.msra.mxu0 %v754
    %816 = vmatprep.subr.mxu0 %v753
    %817 = vmatpush1.msra.mxu0 %v752
    %818 = vmatprep.subr.mxu0 %v751
    %819 = vmatpush1.msra.mxu0 %v750
    %820 = vmatprep.subr.mxu0 %v749
    %821 = vmatpush1.msra.mxu0 %v748
    %822 = vmatprep.subr.mxu0 %v747
    %823 = vmatpush1.msra.mxu0 %v746
    %824 = vmatprep.subr.mxu0 %v745
    %825 = vmatpush1.msra.mxu0 %v744
    %826 = vmatprep.subr.mxu0 %v743
    %827 = vmatpush1.msra.mxu0 %v742
    %828 = vmatprep.subr.mxu0 %v741
    %829 = vmatpush1.msra.mxu0 %v740
    %830 = vmatprep.subr.mxu0 %v739
    %831 = vmatpush1.msra.mxu0 %v738
    %832 = vmatprep.subr.mxu0 %v737
    %833 = vmatpush1.msra.mxu0 %v736
    %834 = vmatprep.subr.mxu0 %v735
    %835 = vmatpush1.msra.mxu0 %v734
    %836 = vmatprep.subr.mxu0 %v797
    %837 = vmatpush2.msra.mxu0 %v796
    %838 = vmatprep.subr.mxu0 %v795
    %839 = vmatpush2.msra.mxu0 %v794
    %840 = vmatprep.subr.mxu0 %v793
    %841 = vmatpush2.msra.mxu0 %v792
    %842 = vmatprep.subr.mxu0 %v791
    %843 = vmatpush2.msra.mxu0 %v790
    %844 = vmatprep.subr.mxu0 %v789
    %845 = vmatpush2.msra.mxu0 %v788
    %846 = vmatprep.subr.mxu0 %v787
    %847 = vmatpush2.msra.mxu0 %v786
    %848 = vmatprep.subr.mxu0 %v785
    %849 = vmatpush2.msra.mxu0 %v784
    %850 = vmatprep.subr.mxu0 %v783
    %851 = vmatpush2.msra.mxu0 %v782
    %852 = vmatprep.subr.mxu0 %v781
    %853 = vmatpush2.msra.mxu0 %v780
    %854 = vmatprep.subr.mxu0 %v779
    %855 = vmatpush2.msra.mxu0 %v778
    %856 = vmatprep.subr.mxu0 %v777
    %857 = vmatpush2.msra.mxu0 %v776
    %858 = vmatprep.subr.mxu0 %v775
    %859 = vmatpush2.msra.mxu0 %v774
    %860 = vmatprep.subr.mxu0 %v773
    %861 = vmatpush2.msra.mxu0 %v772
    %862 = vmatprep.subr.mxu0 %v771
    %863 = vmatpush2.msra.mxu0 %v770
    %864 = vmatprep.subr.mxu0 %v769
    %865 = vmatpush2.msra.mxu0 %v768
    %866 = vmatprep.subr.mxu0 %v767
    %867 = vmatpush2.msra.mxu0 %v766
    %868 = vmatprep.mubr.f32.mxu0 %v801
    %869 = vmatmul.mubr.f32.gmra.mxu0 %v800
    %v870 = vpop.f32.mrf.mxu0
    %v871 = vadd.f32 0.0, %v870
    %v872 = vpop.f32.mrf.mxu0
    %v873 = vadd.f32 0.0, %v872
    %874 = vdwg.mxu0
    %v877 = vcombine.low %v871, %v873
    %v879 = vunpack.c.l.s4 1966171168
    %v880 = vunpack.c.0.s8 %v879
    %v881 = vlaneseq
    %v882 = vshrl.u32 %v881, 7
    %v883 = vsub.s32 %v880, %v882
    %v884 = vrot.slane %v877, %v883
    %v886 = vunpack.c.l.s4 1966171168
    %v887 = vunpack.c.0.s8 %v886
    %v888 = vlaneseq
    %v889 = vshrl.u32 %v888, 7
    %v890 = vsub.s32 %v887, %v889
    %v891 = vrot.slane %v884, %v890
    %v893 = vadd.f32 %v733, %v891
    %v895 = vlaneseq
    %v896 = vshrl.u32 %v895, 7
    %v897 = vsub.s32 0, %v896
    %v898 = vrot.slane %v893, %v897
    %v899 = vlaneseq
    %v900 = vshrl.u32 %v899, 7
    %v901 = vsub.s32 1, %v900
    %v902 = vrot.slane %v893, %v901
    %v905 = vsel %vm534, %v898, -inf
    %v906 = vsel %vm534, %v902, -inf
    %v907 = vmax.f32 %v905, %v906
    %908 = vmax.xlane.f32.xlu0 %v907
    %v909 = vpop.xlane.xlu0 %908
    %v911 = vlaneseq
    %v912 = vshrl.u32 %v911, 7
    %v913 = vsub.s32 0, %v912
    %v914 = vrot.slane %v909, %v913
    %v916 = vsub.f32 %v893, %v914
    %v917 = vmul.f32 %v916, 1.442695
    %v918 = vpow.pop %v917
    %v920 = vlaneseq
    %v921 = vshrl.u32 %v920, 7
    %v922 = vsub.s32 0, %v921
    %v923 = vrot.slane %v918, %v922
    %v924 = vlaneseq
    %v925 = vshrl.u32 %v924, 7
    %v926 = vsub.s32 1, %v925
    %v927 = vrot.slane %v918, %v926
    %v930 = vsel %vm534, %v923, 0.0
    %v931 = vsel %vm534, %v927, 0.0
    %v932 = vadd.f32 %v930, %v931
    %933 = vadd.xlane.f32.xlu0 %v932
    %v934 = vpop.xlane.xlu0 %933
    %v935 = vlog2.pop %v934
    %v936 = vmul.f32 %v935, 0.6931472
    %v938 = vlaneseq
    %v939 = vshrl.u32 %v938, 7
    %v940 = vsub.s32 0, %v939
    %v941 = vrot.slane %v936, %v940
    %v943 = vsub.f32 %v916, %v941
    %s944 = scalar_lea.vmem [#allocation7], 1
    %945 = vst.msk [vmem:[%s944] ss:$2 sm:$0x3] %vm577, %v943
    // Predicated region
    $region30: #{tpu_custom_call.1} parent=1 // pred_check
      _
    $region31: #{tpu_custom_call.1} parent=1 // pred_check_branch
      %947 = sbr.rel (0) target = $region33
    $region32: #{tpu_custom_call.1} parent=1 // pred_region
      %s949 = ssub.s32 64, 64
      %950 = vsyncadd [#allocation4], %s949
      %s952 = sshll.u32 [#allocation7], 4
      %s953 = int_to_ptr.vmem [resolvable:$true] %s952
      %955 = dma.vmem_to_hbm [thread:$0]  %s953, 64, %s5, [#allocation4]
    $region33: #{tpu_custom_call.1} parent=1 // pred_fallthru
      _
    // Predicated region
    $region34: #{tpu_custom_call.1} parent=1 // pred_check
      _
    $region35: #{tpu_custom_call.1} parent=1 // pred_check_branch
      %957 = sbr.rel (0) target = $region37
    $region36: #{tpu_custom_call.1} parent=1 // pred_region
      %958 = dma.done [#allocation4], 64
    $region37: #{tpu_custom_call.1} parent=1 // pred_fallthru
      _
    %959 = vsyncpa [#allocation3], 1
    %960 = vsyncpa [#allocation6], 1
    %961 = vsyncpa [#allocation4], 1

</llo_original>
